<compile_context>
chip_gen: v6e
topology: v6e:2x2x1
jax: 0.10.0
libtpu: 0.0.40
codegen_flags: <defaults>
</compile_context>

<pallas_src>
import math
import functools

import jax
import jax.numpy as jnp
from jax import lax
from jax.experimental import pallas as pl
from jax.experimental.pallas import tpu as pltpu


# ----------------------------- tiling helpers -----------------------------

def _round_up(x, m):
    return (x + m - 1) // m * m


def _row_tile(n, k_pad):
    # sublane-aligned row tile that divides n; cap the resident (tm, K) panel for big K
    cap = 256 if k_pad >= 2048 else 512
    for cand in (512, 256, 128, 64, 32, 16, 8):
        if cand <= cap and n % cand == 0:
            return cand
    return n  # full dim (legal as a full block)


def _col_block(d):
    """Return (lane tile, padded dim) for a column (last) dimension."""
    if d % 128 == 0:
        for cand in (512, 256, 128):
            if d % cand == 0:
                return cand, d
    if d <= 512:
        return d, d                      # full-dim block is always legal
    d_pad = _round_up(d, 128)            # pad instead of a giant unaligned full block
    for cand in (512, 256, 128):
        if d_pad % cand == 0:
            return cand, d_pad
    return 128, d_pad


def _attn_row_tile(n, w):
    # rows per attention grid step: multiple of the window that divides n, target 256
    for cand in (256, 128, 64, 32, 16, 8):
        if cand % w == 0 and n % cand == 0:
            return cand
    return w


# ----------------------------- in-kernel math helpers -----------------------------

def _erf(x):
    # Abramowitz & Stegun 7.1.26 rational approximation (|err| < 1.5e-7).
    # Avoids relying on a lax.erf lowering inside Mosaic; matches exact erf to f32 noise.
    a1, a2, a3, a4, a5 = 0.254829592, -0.284496736, 1.421413741, -1.453152027, 1.061405429
    p = 0.3275911
    ax = jnp.abs(x)
    t = 1.0 / (1.0 + p * ax)
    poly = ((((a5 * t + a4) * t + a3) * t + a2) * t + a1) * t
    y = 1.0 - poly * jnp.exp(-ax * ax)
    return jnp.where(x >= 0, y, -y)


def _gelu_exact(x):
    # matches torch.nn.GELU() (erf formulation) to ~1e-7
    return 0.5 * x * (1.0 + _erf(x * 0.7071067811865476))


# ----------------------------- Pallas kernels -----------------------------

def _linear_kernel(*refs, has_bias, fuse_ln, has_residual, activation, emit_stats):
    it = iter(refs)
    x_ref = next(it)
    w_ref = next(it)
    b_ref = next(it) if has_bias else None
    if fuse_ln:
        mean_ref = next(it); rstd_ref = next(it); g_ref = next(it); beta_ref = next(it)
    res_ref = next(it) if has_residual else None
    o_ref = next(it)
    if emit_stats:
        mo_ref = next(it); ro_ref = next(it)

    if fuse_ln:
        # layernorm (precomputed row stats) applied in f32 in the matmul prologue
        xf = x_ref[...].astype(jnp.float32)
        xf = (xf - mean_ref[...]) * rstd_ref[...] * g_ref[...] + beta_ref[...]
        a = xf.astype(jnp.bfloat16)
    else:
        a = x_ref[...].astype(jnp.bfloat16)

    w = w_ref[...].astype(jnp.bfloat16)          # no-op: weights are stored bf16
    y = jnp.dot(a, w, preferred_element_type=jnp.float32)

    if has_bias:
        y = y + b_ref[...]
    if activation == "gelu":
        y = _gelu_exact(y)
    if has_residual:
        y = y + res_ref[...].astype(jnp.float32)
    if emit_stats:
        # LN stats of this (full-width) output row, consumed by the next fused LN
        mean = jnp.mean(y, axis=-1, keepdims=True)
        var = jnp.mean(jnp.square(y - mean), axis=-1, keepdims=True)
        mo_ref[...] = mean
        ro_ref[...] = lax.rsqrt(var + 1e-5)
    o_ref[...] = y.astype(o_ref.dtype)


def pallas_linear(x, w, b=None, *, activation=None, ln=None, residual=None,
                  emit_ln_stats=False, out_dtype=jnp.bfloat16):
    """y = [+residual] act( (x | LN(x)) @ W [+ b] ); optionally emits (mean, rstd) of y."""
    N, K = x.shape
    Kw, M = w.shape
    assert Kw == K

    tn, m_pad = _col_block(M)
    k_pad = K if (K % 128 == 0 or K <= 512) else _round_up(K, 128)
    if emit_ln_stats:
        assert m_pad == M, "LN-stats epilogue needs an unpadded output width"
        tn = m_pad                                    # epilogue must see full rows
    tm = _row_tile(N, k_pad)

    def pad_cols(a, target):
        return a if a.shape[-1] == target else jnp.pad(a, ((0, 0), (0, target - a.shape[-1])))

    x_p = pad_cols(x, k_pad)
    w_p = w
    if k_pad > K:
        w_p = jnp.pad(w_p, ((0, k_pad - K), (0, 0)))
    if m_pad > M:
        w_p = jnp.pad(w_p, ((0, 0), (0, m_pad - M)))

    operands = [x_p, w_p]
    in_specs = [
        pl.BlockSpec((tm, k_pad), lambda i, j: (i, 0)),   # resident across the j axis
        pl.BlockSpec((k_pad, tn), lambda i, j: (0, j)),   # bf16 weight stream
    ]
    if b is not None:
        operands.append(pad_cols(b.reshape(1, M).astype(jnp.float32), m_pad))
        in_specs.append(pl.BlockSpec((1, tn), lambda i, j: (0, j)))
    if ln is not None:
        mean, rstd, gamma, beta = ln
        operands += [mean, rstd,
                     pad_cols(gamma.reshape(1, K).astype(jnp.float32), k_pad),
                     pad_cols(beta.reshape(1, K).astype(jnp.float32), k_pad)]
        in_specs += [pl.BlockSpec((tm, 1), lambda i, j: (i, 0)),
                     pl.BlockSpec((tm, 1), lambda i, j: (i, 0)),
                     pl.BlockSpec((1, k_pad), lambda i, j: (0, 0)),
                     pl.BlockSpec((1, k_pad), lambda i, j: (0, 0))]
    if residual is not None:
        operands.append(pad_cols(residual, m_pad))
        in_specs.append(pl.BlockSpec((tm, tn), lambda i, j: (i, j)))

    out_shape = [jax.ShapeDtypeStruct((N, m_pad), out_dtype)]
    out_specs = [pl.BlockSpec((tm, tn), lambda i, j: (i, j))]
    if emit_ln_stats:
        out_shape += [jax.ShapeDtypeStruct((N, 1), jnp.float32)] * 2
        out_specs += [pl.BlockSpec((tm, 1), lambda i, j: (i, 0))] * 2

    grid = (N // tm, m_pad // tn)

    outs = pl.pallas_call(
        functools.partial(
            _linear_kernel,
            has_bias=b is not None,
            fuse_ln=ln is not None,
            has_residual=residual is not None,
            activation=activation,
            emit_stats=emit_ln_stats,
        ),
        grid=grid,
        out_shape=out_shape,
        in_specs=in_specs,
        out_specs=out_specs,
        compiler_params=pltpu.CompilerParams(
            dimension_semantics=("parallel", "parallel"),
            vmem_limit_bytes=48 * 1024 * 1024,
        ),
        cost_estimate=pl.CostEstimate(
            flops=2 * N * m_pad * k_pad,
            transcendentals=0,
            bytes_accessed=2 * (N * k_pad + (N // tm) * k_pad * m_pad + N * m_pad),
        ),
    )(*operands)

    y = outs[0]
    if m_pad > M:
        y = y[:, :M]
    if emit_ln_stats:
        return y, outs[1], outs[2]
    return y


def _ln_stats_kernel(x_ref, mean_ref, rstd_ref):
    x = x_ref[...].astype(jnp.float32)
    mean = jnp.mean(x, axis=-1, keepdims=True)
    var = jnp.mean(jnp.square(x - mean), axis=-1, keepdims=True)
    mean_ref[...] = mean
    rstd_ref[...] = lax.rsqrt(var + 1e-5)


def pallas_layernorm_stats(x):
    """Row-tiled layernorm statistics: (mean, rstd), each (N, 1) float32."""
    N, C = x.shape
    tm = _row_tile(N, C)
    outs = pl.pallas_call(
        _ln_stats_kernel,
        grid=(N // tm,),
        out_shape=[jax.ShapeDtypeStruct((N, 1), jnp.float32)] * 2,
        in_specs=[pl.BlockSpec((tm, C), lambda i: (i, 0))],
        out_specs=[pl.BlockSpec((tm, 1), lambda i: (i, 0))] * 2,
        compiler_params=pltpu.CompilerParams(dimension_semantics=("parallel",)),
    )(x)
    return outs[0], outs[1]


def _window_attn_kernel(qkv_ref, bias_ref, o_ref, *, n_head, scale):
    # qkv_ref: (3, H, R, hd) head-major; bias_ref: (R, R) additive mask (0 / -1e30)
    bias = bias_ref[...]
    outs = []
    for h in range(n_head):
        q = qkv_ref[0, h].astype(jnp.bfloat16)                       # (R, hd)
        k = qkv_ref[1, h].astype(jnp.bfloat16)
        v = qkv_ref[2, h].astype(jnp.bfloat16)
        s = lax.dot_general(q, k, (((1,), (1,)), ((), ())),
                            preferred_element_type=jnp.float32)       # (R, R)
        s = s * scale + bias                                          # block-diag + causal
        m = jnp.max(s, axis=-1, keepdims=True)
        p = jnp.exp(s - m)
        denom = jnp.sum(p, axis=-1, keepdims=True)
        p = p * pl.reciprocal(denom, approx=True)
        outs.append(jnp.dot(p.astype(jnp.bfloat16), v,
                            preferred_element_type=jnp.float32))       # (R, hd)
    # one lane-dense full-width store per block
    o_ref[...] = jnp.concatenate(outs, axis=-1).astype(o_ref.dtype)


def pallas_window_attention(qkv, n_head, head_dim, window):
    # qkv: (N, 3C) bf16, layout [q_h0..q_hH | k... | v...]; N is a multiple of window.
    N, threeC = qkv.shape
    C = threeC // 3
    # TODO(synk): head-major repack (reshape+transpose) stays in XLA - layout plumbing so the
    #             kernel gets leading-dim head indexing and a single lane-dense (R, C) store.
    qkvh = qkv.reshape(N, 3, n_head, head_dim).transpose(1, 2, 0, 3)   # (3, H, N, hd)
    R = _attn_row_tile(N, window)
    scale = 1.0 / math.sqrt(head_dim)
    # combined block-diagonal (same window) + causal additive mask, computed once in XLA
    r = jnp.arange(R)
    allowed = (r[:, None] >= r[None, :]) & ((r[:, None] // window) == (r[None, :] // window))
    bias = jnp.where(allowed, 0.0, -1e30).astype(jnp.float32)          # (R, R)

    return pl.pallas_call(
        functools.partial(_window_attn_kernel, n_head=n_head, scale=scale),
        grid=(N // R,),
        out_shape=jax.ShapeDtypeStruct((N, C), jnp.bfloat16),
        in_specs=[pl.BlockSpec((3, n_head, R, head_dim), lambda g: (0, 0, g, 0)),
                  pl.BlockSpec((R, R), lambda g: (0, 0))],
        out_specs=pl.BlockSpec((R, C), lambda g: (g, 0)),
        compiler_params=pltpu.CompilerParams(dimension_semantics=("parallel",)),
    )(qkvh, bias)


# ----------------------------- pure-JAX reference ops (for checking) -----------------------------

def _ref_ln_stats(x):
    xf = x.astype(jnp.float32)
    mean = jnp.mean(xf, axis=-1, keepdims=True)
    var = jnp.mean(jnp.square(xf - mean), axis=-1, keepdims=True)
    return mean, lax.rsqrt(var + 1e-5)


def _ref_linear(x, w, b=None, *, activation=None, ln=None, residual=None,
                emit_ln_stats=False, out_dtype=jnp.bfloat16):
    # mirrors the kernel's mixed precision: bf16 MXU inputs / weights, f32 accumulate
    if ln is not None:
        mean, rstd, g, beta = ln
        xf = (x.astype(jnp.float32) - mean) * rstd * g + beta
        a = xf.astype(jnp.bfloat16)
    else:
        a = x.astype(jnp.bfloat16)
    y = jnp.dot(a, w.astype(jnp.bfloat16), preferred_element_type=jnp.float32)
    if b is not None:
        y = y + b
    if activation == "gelu":
        y = jax.nn.gelu(y, approximate=False)      # exact erf, matches torch.nn.GELU()
    if residual is not None:
        y = y + residual.astype(jnp.float32)
    out = y.astype(out_dtype)
    if emit_ln_stats:
        mean = jnp.mean(y, axis=-1, keepdims=True)
        var = jnp.mean(jnp.square(y - mean), axis=-1, keepdims=True)
        return out, mean, lax.rsqrt(var + 1e-5)
    return out


def _ref_window_attention(qkv, n_head, head_dim, window):
    N, threeC = qkv.shape
    C = threeC // 3
    nwin = N // window
    qkvh = qkv.reshape(nwin, window, 3, n_head, head_dim)
    q = qkvh[:, :, 0].transpose(0, 2, 1, 3).astype(jnp.bfloat16)   # (nwin, H, W, hd)
    k = qkvh[:, :, 1].transpose(0, 2, 1, 3).astype(jnp.bfloat16)
    v = qkvh[:, :, 2].transpose(0, 2, 1, 3).astype(jnp.bfloat16)
    s = jnp.einsum("ghwd,ghxd->ghwx", q, k,
                   preferred_element_type=jnp.float32) / math.sqrt(head_dim)
    row = lax.broadcasted_iota(jnp.int32, (window, window), 0)
    col = lax.broadcasted_iota(jnp.int32, (window, window), 1)
    s = jnp.where((row >= col)[None, None], s, -jnp.inf)
    p = jax.nn.softmax(s, axis=-1)
    o = jnp.einsum("ghwx,ghxd->ghwd", p.astype(jnp.bfloat16), v,
                   preferred_element_type=jnp.float32)
    return o.transpose(0, 2, 1, 3).reshape(N, C).astype(jnp.bfloat16)


# ----------------------------- model -----------------------------

def init_params(key, cfg):
    C, V, L, BS = cfg["n_embd"], cfg["vocab_size"], cfg["n_layer"], cfg["block_size"]
    std = 0.02
    proj_std = 0.02 / math.sqrt(2 * L)             # GPT c_proj special init
    keys = jax.random.split(key, 2 + 4 * L)
    wte = std * jax.random.normal(keys[0], (V, C), jnp.float32)
    params = {
        "wte": wte,                                          # embedding gather (f32)
        "lm_head_w": wte.T.astype(jnp.bfloat16),             # tied weights, pre-transposed bf16
        "wpe": std * jax.random.normal(keys[1], (BS, C), jnp.float32),
        "lnf_g": jnp.ones((C,), jnp.float32),
        "lnf_b": jnp.zeros((C,), jnp.float32),
        "blocks": [],
    }
    for l in range(L):
        k0, k1, k2, k3 = keys[2 + 4 * l: 2 + 4 * l + 4]
        params["blocks"].append(dict(
            ln1_g=jnp.ones((C,), jnp.float32), ln1_b=jnp.zeros((C,), jnp.float32),
            attn_w=(std * jax.random.normal(k0, (C, 3 * C), jnp.float32)).astype(jnp.bfloat16),
            attn_b=jnp.zeros((3 * C,), jnp.float32),
            attn_proj_w=(proj_std * jax.random.normal(k1, (C, C), jnp.float32)).astype(jnp.bfloat16),
            attn_proj_b=jnp.zeros((C,), jnp.float32),
            ln2_g=jnp.ones((C,), jnp.float32), ln2_b=jnp.zeros((C,), jnp.float32),
            fc_w=(std * jax.random.normal(k2, (C, 4 * C), jnp.float32)).astype(jnp.bfloat16),
            fc_b=jnp.zeros((4 * C,), jnp.float32),
            proj_w=(proj_std * jax.random.normal(k3, (4 * C, C), jnp.float32)).astype(jnp.bfloat16),
            proj_b=jnp.zeros((C,), jnp.float32),
        ))
    return params


def gpt_forward(params, idx, cfg, use_pallas=True):
    B, T = idx.shape
    C, H, W, V = cfg["n_embd"], cfg["n_head"], cfg["window_size"], cfg["vocab_size"]
    hd = C // H
    assert C % H == 0 and T <= cfg["block_size"]

    linear = pallas_linear if use_pallas else _ref_linear
    ln_stats = pallas_layernorm_stats if use_pallas else _ref_ln_stats
    attention = pallas_window_attention if use_pallas else _ref_window_attention

    # token + position embeddings (gathers stay in XLA); dropout p=0 -> identity.
    # Pad the token axis ONCE to a multiple of the window and keep it padded through all
    # layers (padded rows never influence real rows: row-wise ops + causal window mask).
    T_pad = _round_up(T, W)
    x = params["wte"][idx] + params["wpe"][:T][None, :, :]
    if T_pad > T:
        x = jnp.pad(x, ((0, 0), (0, T_pad - T), (0, 0)))
    x = x.reshape(B * T_pad, C).astype(jnp.bfloat16)          # bf16 residual stream

    mean, rstd = ln_stats(x)                                  # only standalone LN-stats pass

    for lp in params["blocks"]:
        # attention sub-block: LN1 fused into QKV matmul; residual + LN2-stats fused into proj
        qkv = linear(x, lp["attn_w"], lp["attn_b"],
                     ln=(mean, rstd, lp["ln1_g"], lp["ln1_b"]))
        y = attention(qkv, H, hd, W)
        x, mean, rstd = linear(y, lp["attn_proj_w"], lp["attn_proj_b"],
                               residual=x, emit_ln_stats=True)

        # MLP sub-block: LN2 fused into fc matmul (+ erf GELU); residual + next-LN stats fused
        m = linear(x, lp["fc_w"], lp["fc_b"], activation="gelu",
                   ln=(mean, rstd, lp["ln2_g"], lp["ln2_b"]))
        x, mean, rstd = linear(m, lp["proj_w"], lp["proj_b"],
                               residual=x, emit_ln_stats=True)

    # final LN fused into the lm_head matmul; weight tied to wte (pre-transposed bf16 copy)
    logits = linear(x, params["lm_head_w"], None,
                    ln=(mean, rstd, params["lnf_g"], params["lnf_b"]),
                    out_dtype=jnp.float32)
    return logits.reshape(B, T_pad, V)[:, :T, :]


# ----------------------------- main -----------------------------

if __name__ == "__main__":
    cfg = dict(
        n_layer=2, n_head=4, n_embd=64,
        window_size=8, block_size=64, vocab_size=512,
        dropout=0.0, bias=True,
    )
    key = jax.random.PRNGKey(0)
    pkey, ikey = jax.random.split(key)
    params = init_params(pkey, cfg)

    B, T = 2, 12   # T not a multiple of window_size -> exercises the one-time padding path
    idx = jax.random.randint(ikey, (B, T), 0, cfg["vocab_size"], dtype=jnp.int32)

    logits = jax.block_until_ready(gpt_forward(params, idx, cfg, use_pallas=True))
    ref = jax.block_until_ready(gpt_forward(params, idx, cfg, use_pallas=False))

    assert logits.shape == (B, T, cfg["vocab_size"])
    assert bool(jnp.all(jnp.isfinite(logits))), "non-finite logits"
    max_err = float(jnp.max(jnp.abs(logits - ref)))
    assert jnp.allclose(logits, ref, rtol=2e-2, atol=2e-2), f"mismatch, max abs err {max_err}"

    print("KERNEL_OK")
</pallas_src>

<mosaic_0001>
module attributes {stable_mosaic.version = 11 : i64} {
  func.func @_ln_stats_kernel(%arg0: i32, %arg1: memref<32x64xbf16, #tpu.memory_space<vmem>>, %arg2: memref<32x1xf32, #tpu.memory_space<vmem>>, %arg3: memref<32x1xf32, #tpu.memory_space<vmem>>) attributes {dimension_semantics = [#tpu.dimension_semantics<parallel>], iteration_bounds = array<i64: 1>, scalar_prefetch = 0 : i64, scratch_operands = 0 : i64, tpu.core_type = #tpu.core_type<tc>, window_params = [{transform_indices = @transform_0, window_bounds = array<i64: 32, 64>}, {transform_indices = @transform_1, window_bounds = array<i64: 32, 1>}, {transform_indices = @transform_2, window_bounds = array<i64: 32, 1>}]} {
    %c0 = arith.constant 0 : index
    %c0_0 = arith.constant 0 : index
    %0 = vector.load %arg1[%c0, %c0_0] : memref<32x64xbf16, #tpu.memory_space<vmem>>, vector<32x64xbf16>
    %1 = arith.extf %0 : vector<32x64xbf16> to vector<32x64xf32>
    %cst = arith.constant dense<0.000000e+00> : vector<32xf32>
    %2 = vector.multi_reduction <add>, %1, %cst [1] : vector<32x64xf32> to vector<32xf32>
    %3 = vector.shape_cast %2 : vector<32xf32> to vector<32x1xf32>
    %cst_1 = arith.constant 6.400000e+01 : f32
    %4 = vector.broadcast %cst_1 : f32 to vector<32x1xf32>
    %5 = arith.divf %3, %4 : vector<32x1xf32>
    %6 = vector.broadcast %5 : vector<32x1xf32> to vector<32x64xf32>
    %7 = arith.subf %1, %6 : vector<32x64xf32>
    %8 = arith.mulf %7, %7 : vector<32x64xf32>
    %cst_2 = arith.constant dense<0.000000e+00> : vector<32xf32>
    %9 = vector.multi_reduction <add>, %8, %cst_2 [1] : vector<32x64xf32> to vector<32xf32>
    %10 = vector.shape_cast %9 : vector<32xf32> to vector<32x1xf32>
    %cst_3 = arith.constant 6.400000e+01 : f32
    %11 = vector.broadcast %cst_3 : f32 to vector<32x1xf32>
    %12 = arith.divf %10, %11 : vector<32x1xf32>
    %c0_4 = arith.constant 0 : index
    %c0_5 = arith.constant 0 : index
    %13 = vector.load %arg2[%c0_4, %c0_5] : memref<32x1xf32, #tpu.memory_space<vmem>>, vector<32x1xf32>
    tpu.vector_store %arg2[%c0_4, %c0_5], %5 {strides = array<i32>} : memref<32x1xf32, #tpu.memory_space<vmem>>, vector<32x1xf32>,
    %cst_6 = arith.constant 9.99999974E-6 : f32
    %14 = vector.broadcast %cst_6 : f32 to vector<32x1xf32>
    %15 = arith.addf %12, %14 : vector<32x1xf32>
    %16 = math.rsqrt %15 : vector<32x1xf32>
    %c0_7 = arith.constant 0 : index
    %c0_8 = arith.constant 0 : index
    %17 = vector.load %arg3[%c0_7, %c0_8] : memref<32x1xf32, #tpu.memory_space<vmem>>, vector<32x1xf32>
    tpu.vector_store %arg3[%c0_7, %c0_8], %16 {strides = array<i32>} : memref<32x1xf32, #tpu.memory_space<vmem>>, vector<32x1xf32>,
    return
  }
  func.func @transform_0(%arg0: i32) -> (i32, i32) {
    %c0_i32 = arith.constant 0 : i32
    %c0_i32_0 = arith.constant 0 : i32
    return %arg0, %c0_i32 : i32, i32
  }
  func.func @transform_1(%arg0: i32) -> (i32, i32) {
    %c0_i32 = arith.constant 0 : i32
    %c0_i32_0 = arith.constant 0 : i32
    return %arg0, %c0_i32 : i32, i32
  }
  func.func @transform_2(%arg0: i32) -> (i32, i32) {
    %c0_i32 = arith.constant 0 : i32
    %c0_i32_0 = arith.constant 0 : i32
    return %arg0, %c0_i32 : i32, i32
  }
}

</mosaic_0001>

<llo_original>
// kernel: tpu_custom_call.1
$region0: #{tpu_custom_call.1}
  #allocation0 [shape = 'u32[]', space=smem, size = 0x4, offset = 0x4, fixed_abs, tag = 'smem constant byte address 0x4 - core index']
  #allocation1 [shape = 'u32[144,128]{1,0:T(1,128)}', space=vmem, size = 0x12000, scoped, tag = 'internal scratch']
  %s0 = inlined_call_operand.hbm [shape: bf16[32,64], index: 0, kind: input, shape index: {}]
  %s1 = inlined_call_operand.vmem [shape: f32[32,1], index: 1, kind: output, shape index: {0}]
  %s2 = inlined_call_operand.vmem [shape: f32[32,1], index: 2, kind: output, shape index: {1}]
  %3 = xla_tuple %s1, %s2
  %s4 = sld [smem:[#allocation0]]
  $region26: #{tpu_custom_call.1} parent=0
    _
  %s6 = ssub.s32 1, %s4
  %s7 = scalar_select 0, %s6, %s4
  $region1: #{tpu_custom_call.1} parent=0
    #allocation2 [shape = 'u8[8192]{0}', space=vmem, size = 0x2000, scoped, tag = 'input window, operand 0, single buffered']
    #allocation3 [shape = 's32[1]{0}', space=sflag, size = 0x4, scoped, tag = 'scoped memory for tpu_custom_call.1']
    %8 = vsyncpa [#allocation3], 0
    // Predicated region
    $region2: #{tpu_custom_call.1} parent=1 // pred_check
      _
    $region3: #{tpu_custom_call.1} parent=1 // pred_check_branch
      %10 = sbr.rel (0) target = $region5
    $region4: #{tpu_custom_call.1} parent=1 // pred_region
      %s12 = ssub.s32 256, 256
      %13 = vsyncadd [#allocation3], %s12
      %s14 = sshll.u32 [#allocation2], 4
      %s15 = int_to_ptr.vmem [resolvable:$true] %s14
      %20 = dma.hbm_to_vmem [thread:$0]  %s0, 256, %s15, [#allocation3], 64, 64, 4
    $region5: #{tpu_custom_call.1} parent=1 // pred_fallthru
      _
    // Predicated region
    $region6: #{tpu_custom_call.1} parent=1 // pred_check
      _
    $region7: #{tpu_custom_call.1} parent=1 // pred_check_branch
      %22 = sbr.rel (0) target = $region9
    $region8: #{tpu_custom_call.1} parent=1 // pred_region
      %23 = dma.done [#allocation3], 256
    $region9: #{tpu_custom_call.1} parent=1 // pred_fallthru
      _
    %v24 = vld [vmem:[#allocation2] sm:$0xf]
    %v25 = vld [vmem:[#allocation2 + $0x4] sm:$0xf]
    %v26 = vld [vmem:[#allocation2 + $0x8] sm:$0xf]
    %v27 = vld [vmem:[#allocation2 + $0xc] sm:$0xf]
    %v28 = vunpack.c.l.bf16 %v24
    %v29 = vunpack.c.l.bf16 %v25
    %v30 = vunpack.c.l.bf16 %v26
    %v31 = vunpack.c.l.bf16 %v27
    %vm32 = vcmask 523264
    %v33 = vsel %vm32, %v28, 0.0
    %34 = vadd.xlane.f32.xlu0 %v33
    %v35 = vpop.xlane.xlu0 %34
    %v36 = vsel %vm32, %v29, 0.0
    %37 = vadd.xlane.f32.xlu0 %v36
    %v38 = vpop.xlane.xlu0 %37
    %v39 = vsel %vm32, %v30, 0.0
    %40 = vadd.xlane.f32.xlu0 %v39
    %v41 = vpop.xlane.xlu0 %40
    %v42 = vsel %vm32, %v31, 0.0
    %43 = vadd.xlane.f32.xlu0 %v42
    %v44 = vpop.xlane.xlu0 %43
    %v45 = vrcp.pop 64.0
    %v46 = vmul.f32 %v35, %v45
    %v47 = vmul.f32 %v38, %v45
    %v48 = vmul.f32 %v41, %v45
    %v49 = vmul.f32 %v44, %v45
    %v50 = vsub.f32 %v28, %v46
    %v51 = vsub.f32 %v29, %v47
    %v52 = vsub.f32 %v30, %v48
    %v53 = vsub.f32 %v31, %v49
    %v54 = vmul.f32 %v50, %v50
    %v55 = vmul.f32 %v51, %v51
    %v56 = vmul.f32 %v52, %v52
    %v57 = vmul.f32 %v53, %v53
    %v58 = vsel %vm32, %v54, 0.0
    %59 = vadd.xlane.f32.xlu0 %v58
    %v60 = vpop.xlane.xlu0 %59
    %v61 = vsel %vm32, %v55, 0.0
    %62 = vadd.xlane.f32.xlu0 %v61
    %v63 = vpop.xlane.xlu0 %62
    %v64 = vsel %vm32, %v56, 0.0
    %65 = vadd.xlane.f32.xlu0 %v64
    %v66 = vpop.xlane.xlu0 %65
    %v67 = vsel %vm32, %v57, 0.0
    %68 = vadd.xlane.f32.xlu0 %v67
    %v69 = vpop.xlane.xlu0 %68
    %v70 = vmul.f32 %v60, %v45
    %v71 = vmul.f32 %v63, %v45
    %v72 = vmul.f32 %v66, %v45
    %v73 = vmul.f32 %v69, %v45
    %vm74 = vcmask 7168
    %75 = vst.msk [vmem:[%s1] sm:$0xff] %vm74, %v46
    %76 = vst.msk [vmem:[%s1 + $0x8] sm:$0xff] %vm74, %v47
    %77 = vst.msk [vmem:[%s1 + $0x10] sm:$0xff] %vm74, %v48
    %78 = vst.msk [vmem:[%s1 + $0x18] sm:$0xff] %vm74, %v49
    %v79 = vadd.f32 %v70, 1e-05
    %v80 = vadd.f32 %v71, 1e-05
    %v81 = vadd.f32 %v72, 1e-05
    %v82 = vadd.f32 %v73, 1e-05
    %v83 = vrsqrt.pop %v79
    %v84 = vrsqrt.pop %v80
    %v85 = vrsqrt.pop %v81
    %v86 = vrsqrt.pop %v82
    %87 = vst.msk [vmem:[%s2] sm:$0xff] %vm74, %v83
    %88 = vst.msk [vmem:[%s2 + $0x8] sm:$0xff] %vm74, %v84
    %89 = vst.msk [vmem:[%s2 + $0x10] sm:$0xff] %vm74, %v85
    %90 = vst.msk [vmem:[%s2 + $0x18] sm:$0xff] %vm74, %v86
    // Predicated region
    $region10: #{tpu_custom_call.1} parent=1 // pred_check
      _
    $region11: #{tpu_custom_call.1} parent=1 // pred_check_branch
      %92 = sbr.rel (0) target = $region13
    $region12: #{tpu_custom_call.1} parent=1 // pred_region
      _
    $region13: #{tpu_custom_call.1} parent=1 // pred_fallthru
      _
    // Predicated region
    $region14: #{tpu_custom_call.1} parent=1 // pred_check
      _
    $region15: #{tpu_custom_call.1} parent=1 // pred_check_branch
      %94 = sbr.rel (0) target = $region17
    $region16: #{tpu_custom_call.1} parent=1 // pred_region
      _
    $region17: #{tpu_custom_call.1} parent=1 // pred_fallthru
      _
    // Predicated region
    $region18: #{tpu_custom_call.1} parent=1 // pred_check
      _
    $region19: #{tpu_custom_call.1} parent=1 // pred_check_branch
      %96 = sbr.rel (0) target = $region21
    $region20: #{tpu_custom_call.1} parent=1 // pred_region
      _
    $region21: #{tpu_custom_call.1} parent=1 // pred_fallthru
      _
    // Predicated region
    $region22: #{tpu_custom_call.1} parent=1 // pred_check
      _
    $region23: #{tpu_custom_call.1} parent=1 // pred_check_branch
      %98 = sbr.rel (0) target = $region25
    $region24: #{tpu_custom_call.1} parent=1 // pred_region
      _
    $region25: #{tpu_custom_call.1} parent=1 // pred_fallthru
      _
    %99 = vsyncpa [#allocation3], 1

</llo_original>
